<compile_context>
chip_gen: v6e
topology: v6e:2x2x1
jax: 0.10.0
libtpu: 0.0.40
codegen_flags: <defaults>
</compile_context>

<pallas_src>
import functools

import numpy as np
import jax
import jax.numpy as jnp
from jax.experimental import pallas as pl
from jax.experimental.pallas import tpu as pltpu

L0 = 27          # dconv1 input length
Q = L0 + 1       # q1 positions per batch (incl. one zero-pad position)
NPH = 64         # 4*4*4 phase combinations = valid lanes of the final output block
NOUT = 128       # output lanes (padded to a full vreg lane width for unmasked stores)


def _k1_padded(latent_dim):
    """Padded K for the fused (Linear+ConvT1) matmul (multiple of 16 for bf16 tiling)."""
    return ((Q * (latent_dim + 1) + 15) // 16) * 16


# ---------------------------------------------------------------------------
# Host-side, one-time parameter repacking (run once at parameter-load time).
# ---------------------------------------------------------------------------
def _conv_mats(w, b, G):
    """ConvTranspose1d(k=7,s=4) as (A, B, bias): out_row = cur_row@A + prev_row@B + bias."""
    w = np.asarray(w, np.float64)
    b = np.asarray(b, np.float64)
    Cin, Cout, K = w.shape
    w_hi = np.zeros((Cin, Cout, 4), np.float64)
    w_hi[:, :, :3] = w[:, :, 4:7]                       # taps 4..6 ; tap "7" = 0
    A = np.zeros((G * Cin, 4 * G * Cout), np.float64)
    Bm = np.zeros((G * Cin, 4 * G * Cout), np.float64)
    for g in range(G):                                   # input phase-group
        for p in range(4):                               # new output phase
            col = slice((4 * g + p) * Cout, (4 * g + p + 1) * Cout)
            A[g * Cin:(g + 1) * Cin, col] += w[:, :, p]              # current tap
            if g >= 1:                                                # previous tap, same row
                A[(g - 1) * Cin:g * Cin, col] += w_hi[:, :, p]
            else:                                                     # previous tap, prev q1 row
                Bm[(G - 1) * Cin:G * Cin, col] += w_hi[:, :, p]
    return A, Bm, np.tile(b, 4 * G)


def pack_decoder_params(params, filters):
    f = filters
    C0, C1, C2, C3 = 4 * f, 4 * f, 2 * f, f

    W_lin, b_lin = [np.asarray(t, np.float64) for t in params["lin2blue"]]
    w1, b1 = params["dconv1blue"]
    w2, b2 = params["dconv2blue"]
    w3, b3 = params["dconv3blue"]
    w4, b4 = params["dconv4blue"]
    D = W_lin.shape[1]
    Dp, K1p = D + 1, _k1_padded(D)

    A1, B1, b1t = _conv_mats(w1, b1, 1)        # (C0, 4C1)
    A2, B2, b2t = _conv_mats(w2, b2, 4)        # (4C1, 16C2)
    A3, B3, b3t = _conv_mats(w3, b3, 16)       # (16C2, 64C3)
    N1, N2, N3 = 4 * C1, 16 * C2, 64 * C3

    # Per-q1 Linear weights (q == 27 is the zero-pad row).
    Wq = np.zeros((Q, D, C0), np.float64)
    bq = np.zeros((Q, C0), np.float64)
    for q in range(L0):
        Wq[q] = W_lin[q::L0, :].T              # rows c0*27+q, transposed -> (D, C0)
        bq[q] = b_lin[q::L0]

    # Fused Linear + ConvT1 per q1:  y1_row(q) = [z_b, 1] @ [M_q ; c_q]
    M = np.zeros((Q, D, N1), np.float64)
    cvec = np.zeros((Q, N1), np.float64)
    for q in range(Q):
        M[q] = Wq[q] @ A1
        cvec[q] = bq[q] @ A1 + b1t
        if q >= 1:
            M[q] += Wq[q - 1] @ B1
            cvec[q] += bq[q - 1] @ B1

    def w1_block(shift):
        """Fused layer-1 weights producing y1 at row (q - shift); zero for q < shift."""
        Wv = np.zeros((K1p, N1), np.float64)
        for q in range(Q):
            qs = q - shift
            if qs < 0:
                continue
            Wv[q * Dp:q * Dp + D, :] = M[qs]
            Wv[q * Dp + D, :] = cvec[qs]
        return Wv

    # Columns: [y1 | y1(prev row) | y1(prev-prev row)]  -> no in-kernel row shift needed.
    W1cat = np.concatenate([w1_block(0), w1_block(1), w1_block(2)], axis=1)   # (K1p, 3*N1)

    # ConvT2:  [y1 | y1p | y1pp] -> [y2 | y2(prev row)]
    W2cat = np.zeros((3 * N1, 2 * N2), np.float64)
    W2cat[0:N1,        0:N2] = A2
    W2cat[N1:2 * N1,   0:N2] = B2
    W2cat[N1:2 * N1,   N2:2 * N2] = A2
    W2cat[2 * N1:3 * N1, N2:2 * N2] = B2
    b2cat = np.concatenate([b2t, b2t])

    # ConvT3:  [y2 | y2prev] -> y3
    W3AB = np.concatenate([A3, B3], axis=0)                                    # (2*N2, N3)

    # ConvT4 (1x1), padded to NOUT lanes for an unmasked (lane-dense) store.
    w4v = np.asarray(w4, np.float64)[:, 0, 0]
    W4p = np.zeros((N3, NOUT), np.float64)
    for g in range(NPH):
        W4p[g * C3:(g + 1) * C3, g] = w4v
    b4p = np.zeros((NOUT,), np.float64)
    b4p[:NPH] = float(np.asarray(b4, np.float64)[0])

    # ---- consolidate into 2 bf16 weight blobs + 1 f32 bias blob ----
    lanes_a = max(3 * N1, NOUT)
    wb_a = np.zeros((K1p + N3, lanes_a), np.float64)          # W1cat + W4p
    wb_a[0:K1p, 0:3 * N1] = W1cat
    wb_a[K1p:K1p + N3, 0:NOUT] = W4p

    wb_b = np.zeros((3 * N1 + 2 * N2, 2 * N2), np.float64)    # W2cat + W3AB
    wb_b[0:3 * N1, :] = W2cat
    wb_b[3 * N1:, :] = W3AB

    lanes_c = max(2 * N2, N3, NOUT)
    biases = np.zeros((3, lanes_c), np.float64)
    biases[0, :2 * N2] = b2cat
    biases[1, :N3] = b3t
    biases[2, :NOUT] = b4p

    return dict(wb_a=jnp.asarray(wb_a, jnp.bfloat16),
                wb_b=jnp.asarray(wb_b, jnp.bfloat16),
                biases=jnp.asarray(biases, jnp.float32))


@functools.lru_cache(maxsize=None)
def _row_flags(bsz):
    """(rows, 2) f32: col0 = 1 at q1 == Q-1 rows, col1 = 1 at q1 == 0 rows (batch-major)."""
    fl = np.zeros((Q * bsz, 2), np.float32)
    fl[Q - 1::Q, 0] = 1.0
    fl[0::Q, 1] = 1.0
    return jnp.asarray(fl)


# ---------------------------------------------------------------------------
# The single fused Pallas kernel: 4 MXU matmuls + bias/ReLU/mask on the VPU.
# ---------------------------------------------------------------------------
def _decoder_kernel(zexp_ref, wa_ref, wb_ref, bias_ref, flags_ref, out_ref, *,
                    k1p, n1, n2, n3, nout, t1lo, t2lo):
    def mm(a, w):
        return jnp.dot(a.astype(jnp.bfloat16), w, preferred_element_type=jnp.float32)

    is_last = flags_ref[:, 0:1] > 0.5          # (rows, 1): q1 == 27
    is_q0 = flags_ref[:, 1:2] > 0.5            # (rows, 1): q1 == 0

    # ---- Linear + dconv1blue fused (also yields the two row-shifted copies) ----
    h1 = jnp.maximum(mm(zexp_ref[...], wa_ref[0:k1p, 0:3 * n1]), 0.0)       # (rows, 3*n1)
    l1 = jax.lax.broadcasted_iota(jnp.int32, h1.shape, 1)
    bad1 = jnp.logical_and(is_last, jnp.logical_and(l1 >= t1lo, l1 < n1))   # past-the-end pos
    h1 = jnp.where(bad1, 0.0, h1)

    # ---- dconv2blue: produces [y2 | y2(prev row)] in one matmul ----
    y2c = jnp.maximum(mm(h1, wb_ref[0:3 * n1, :]) + bias_ref[0:1, 0:2 * n2], 0.0)
    l2 = jax.lax.broadcasted_iota(jnp.int32, y2c.shape, 1)
    bad2 = jnp.logical_or(
        jnp.logical_and(is_last, jnp.logical_and(l2 >= t2lo, l2 < n2)),     # past-the-end pos
        jnp.logical_and(is_q0, l2 >= n2))                                   # no prev row at q1==0
    y2c = jnp.where(bad2, 0.0, y2c)

    # ---- dconv3blue ----
    y3 = jnp.maximum(mm(y2c, wb_ref[3 * n1:3 * n1 + 2 * n2, :]) + bias_ref[1:2, 0:n3], 0.0)

    # ---- dconv4blue (1x1), 128-lane (lane-dense) output ----
    out_ref[...] = mm(y3, wa_ref[k1p:k1p + n3, 0:nout]) + bias_ref[2:3, 0:nout]


# ---------------------------------------------------------------------------
# Forward wrapper: tiny z-expansion, one pallas_call, slice+reshape (no transpose).
# ---------------------------------------------------------------------------
def decoder_blue_forward(z, packed, filters):
    f = filters
    bsz, D = z.shape
    rows = Q * bsz
    c1, c2 = 4 * f, 2 * f
    n1, n2, n3 = 4 * c1, 16 * c2, 64 * f
    k1p = _k1_padded(D)

    # Block-diagonal z-expansion: row (b, q1) holds [z_b, 1] in lane block q1.
    zb = jnp.concatenate([z, jnp.ones((bsz, 1), z.dtype)], axis=1)           # (B, D+1)
    eye = jnp.eye(Q, dtype=z.dtype)
    zexp = (eye[None, :, :, None] * zb[:, None, None, :]).reshape(rows, Q * (D + 1))
    zexp = jnp.pad(zexp, ((0, 0), (0, k1p - Q * (D + 1)))).astype(jnp.bfloat16)

    flags = _row_flags(bsz)
    operands = (zexp, packed["wb_a"], packed["wb_b"], packed["biases"], flags)

    kernel = functools.partial(_decoder_kernel, k1p=k1p, n1=n1, n2=n2, n3=n3,
                               nout=NOUT, t1lo=3 * c1, t2lo=15 * c2)

    out = pl.pallas_call(
        kernel,
        out_shape=jax.ShapeDtypeStruct((rows, NOUT), jnp.float32),
        grid=(1,),                                   # tiny problem: single program, all in VMEM
        in_specs=[pl.BlockSpec(a.shape, lambda i: (0, 0)) for a in operands],
        out_specs=pl.BlockSpec((rows, NOUT), lambda i: (0, 0)),
        compiler_params=pltpu.CompilerParams(dimension_semantics=("arbitrary",)),
    )(*operands)

    # Rows are batch-major: per-batch row-major flatten is the time axis already.
    y = out[:, :NPH].reshape(bsz, Q * NPH)[:, : Q * NPH - 1]
    return y[:, None, :]                              # (B, 1, 1791)


# ---------------------------------------------------------------------------
# Pure-numpy reference (direct scatter form of ConvTranspose1d) for validation.
# ---------------------------------------------------------------------------
def _ref_conv_transpose1d(x, w, b, stride, relu):
    B, C_in, L = x.shape
    _, C_out, K = w.shape
    L_out = (L - 1) * stride + K
    out = np.zeros((B, C_out, L_out), np.float32)
    for kk in range(K):
        out[:, :, kk: kk + stride * (L - 1) + 1: stride] += np.einsum(
            "bci,co->boi", x, w[:, :, kk])
    out += b[None, :, None]
    if relu:
        out = np.maximum(out, 0.0)
    return out


def ref_forward(z, params, filters):
    W_lin, b_lin = params["lin2blue"]
    y = z @ W_lin.T + b_lin
    y = y.reshape(-1, 4 * filters, 27)
    y = _ref_conv_transpose1d(y, *params["dconv1blue"], stride=4, relu=True)
    y = _ref_conv_transpose1d(y, *params["dconv2blue"], stride=4, relu=True)
    y = _ref_conv_transpose1d(y, *params["dconv3blue"], stride=4, relu=True)
    y = _ref_conv_transpose1d(y, *params["dconv4blue"], stride=1, relu=False)
    return y


# ---------------------------------------------------------------------------
if __name__ == "__main__":
    filters, latent_dim, B = 4, 8, 2

    key = jax.random.PRNGKey(0)
    kz, *pk = jax.random.split(key, 11)

    def u(k, shape, scale=0.1):
        return jax.random.uniform(k, shape, jnp.float32, -scale, scale)

    # Parameter shapes mirror the PyTorch module (weights are synthetic).
    params = {
        "lin2blue":   (u(pk[0], (4 * filters * 27, latent_dim)), u(pk[1], (4 * filters * 27,))),
        "dconv1blue": (u(pk[2], (4 * filters, 4 * filters, 7)),  u(pk[3], (4 * filters,))),
        "dconv2blue": (u(pk[4], (4 * filters, 2 * filters, 7)),  u(pk[5], (2 * filters,))),
        "dconv3blue": (u(pk[6], (2 * filters, filters, 7)),      u(pk[7], (filters,))),
        "dconv4blue": (u(pk[8], (filters, 1, 1)),                u(pk[9], (1,))),
    }

    z = jax.random.normal(kz, (B, latent_dim), jnp.float32)

    np_params = {k: tuple(np.asarray(t) for t in v) for k, v in params.items()}
    packed = pack_decoder_params(np_params, filters)       # one-time repack (bf16 blobs)

    fwd = jax.jit(functools.partial(decoder_blue_forward, filters=filters))
    out = jax.block_until_ready(fwd(z, packed))
    assert out.shape == (B, 1, 1791), out.shape

    ref = ref_forward(np.asarray(z), np_params, filters)
    np.testing.assert_allclose(np.asarray(out), ref, rtol=1e-2, atol=1e-2)

    print("KERNEL_OK")
</pallas_src>

<mosaic_0001>
module attributes {stable_mosaic.version = 11 : i64} {
  func.func @_decoder_kernel(%arg0: i32, %arg1: memref<56x256xbf16, #tpu.memory_space<vmem>>, %arg2: memref<512x192xbf16, #tpu.memory_space<vmem>>, %arg3: memref<448x256xbf16, #tpu.memory_space<vmem>>, %arg4: memref<3x256xf32, #tpu.memory_space<vmem>>, %arg5: memref<56x2xf32, #tpu.memory_space<vmem>>, %arg6: memref<56x128xf32, #tpu.memory_space<vmem>>) attributes {dimension_semantics = [#tpu.dimension_semantics<arbitrary>], iteration_bounds = array<i64: 1>, scalar_prefetch = 0 : i64, scratch_operands = 0 : i64, tpu.core_type = #tpu.core_type<tc>, window_params = [{pipeline_mode = #tpu.pipeline_mode<synchronous>, transform_indices = @transform_0, window_bounds = array<i64: 56, 256>}, {pipeline_mode = #tpu.pipeline_mode<synchronous>, transform_indices = @transform_1, window_bounds = array<i64: 512, 192>}, {pipeline_mode = #tpu.pipeline_mode<synchronous>, transform_indices = @transform_2, window_bounds = array<i64: 448, 256>}, {pipeline_mode = #tpu.pipeline_mode<synchronous>, transform_indices = @transform_3, window_bounds = array<i64: 3, 256>}, {pipeline_mode = #tpu.pipeline_mode<synchronous>, transform_indices = @transform_4, window_bounds = array<i64: 56, 2>}, {pipeline_mode = #tpu.pipeline_mode<synchronous>, transform_indices = @transform_5, window_bounds = array<i64: 56, 128>}]} {
    %c0 = arith.constant 0 : index
    %c0_0 = arith.constant 0 : index
    %0 = vector.load %arg5[%c0, %c0_0] : memref<56x2xf32, #tpu.memory_space<vmem>>, vector<56x1xf32>
    %cst = arith.constant 5.000000e-01 : f32
    %1 = vector.broadcast %cst : f32 to vector<56x1xf32>
    %2 = arith.cmpf ogt, %0, %1 : vector<56x1xf32>
    %c0_1 = arith.constant 0 : index
    %c1 = arith.constant 1 : index
    %3 = vector.load %arg5[%c0_1, %c1] : memref<56x2xf32, #tpu.memory_space<vmem>>, vector<56x1xf32>
    %cst_2 = arith.constant 5.000000e-01 : f32
    %4 = vector.broadcast %cst_2 : f32 to vector<56x1xf32>
    %5 = arith.cmpf ogt, %3, %4 : vector<56x1xf32>
    %c0_3 = arith.constant 0 : index
    %c0_4 = arith.constant 0 : index
    %6 = vector.load %arg1[%c0_3, %c0_4] : memref<56x256xbf16, #tpu.memory_space<vmem>>, vector<56x256xbf16>
    %c0_5 = arith.constant 0 : index
    %c0_6 = arith.constant 0 : index
    %7 = vector.load %arg2[%c0_5, %c0_6] : memref<512x192xbf16, #tpu.memory_space<vmem>>, vector<256x192xbf16>
    %cst_7 = arith.constant dense<0.000000e+00> : vector<56x192xf32>
    %8 = tpu.matmul %6, %7, %cst_7 {dimension_numbers = #tpu.dot_dimension_numbers<[1], [0], [0], [1], [0, 0, 1, 1], [], []>} : vector<56x256xbf16>, vector<256x192xbf16>, vector<56x192xf32> -> vector<56x192xf32>
    %cst_8 = arith.constant 0.000000e+00 : f32
    %9 = vector.broadcast %cst_8 : f32 to vector<56x192xf32>
    %10 = arith.maximumf %8, %9 : vector<56x192xf32>
    %11 = tpu.iota {dimensions = array<i32: 1>} : vector<56x192xi32>
    %c48_i32 = arith.constant 48 : i32
    %12 = vector.broadcast %c48_i32 : i32 to vector<56x192xi32>
    %13 = arith.cmpi sge, %11, %12 : vector<56x192xi32>
    %c64_i32 = arith.constant 64 : i32
    %14 = vector.broadcast %c64_i32 : i32 to vector<56x192xi32>
    %15 = arith.cmpi slt, %11, %14 : vector<56x192xi32>
    %16 = arith.andi %13, %15 : vector<56x192xi1>
    %17 = vector.broadcast %2 : vector<56x1xi1> to vector<56x192xi1>
    %18 = arith.andi %17, %16 : vector<56x192xi1>
    %cst_9 = arith.constant 0.000000e+00 : f32
    %19 = vector.broadcast %cst_9 : f32 to vector<56x192xf32>
    %20 = arith.select %18, %19, %10 : vector<56x192xi1>, vector<56x192xf32>
    %c0_10 = arith.constant 0 : index
    %c0_11 = arith.constant 0 : index
    %21 = vector.load %arg3[%c0_10, %c0_11] : memref<448x256xbf16, #tpu.memory_space<vmem>>, vector<192x256xbf16>
    %22 = arith.truncf %20 : vector<56x192xf32> to vector<56x192xbf16>
    %cst_12 = arith.constant dense<0.000000e+00> : vector<56x256xf32>
    %23 = tpu.matmul %22, %21, %cst_12 {dimension_numbers = #tpu.dot_dimension_numbers<[1], [0], [0], [1], [0, 0, 1, 1], [], []>} : vector<56x192xbf16>, vector<192x256xbf16>, vector<56x256xf32> -> vector<56x256xf32>
    %c0_13 = arith.constant 0 : index
    %c0_14 = arith.constant 0 : index
    %24 = vector.load %arg4[%c0_13, %c0_14] : memref<3x256xf32, #tpu.memory_space<vmem>>, vector<1x256xf32>
    %25 = vector.broadcast %24 : vector<1x256xf32> to vector<56x256xf32>
    %26 = arith.addf %23, %25 : vector<56x256xf32>
    %cst_15 = arith.constant 0.000000e+00 : f32
    %27 = vector.broadcast %cst_15 : f32 to vector<56x256xf32>
    %28 = arith.maximumf %26, %27 : vector<56x256xf32>
    %29 = tpu.iota {dimensions = array<i32: 1>} : vector<56x256xi32>
    %c120_i32 = arith.constant 120 : i32
    %30 = vector.broadcast %c120_i32 : i32 to vector<56x256xi32>
    %31 = arith.cmpi sge, %29, %30 : vector<56x256xi32>
    %c128_i32 = arith.constant 128 : i32
    %32 = vector.broadcast %c128_i32 : i32 to vector<56x256xi32>
    %33 = arith.cmpi slt, %29, %32 : vector<56x256xi32>
    %34 = arith.andi %31, %33 : vector<56x256xi1>
    %35 = vector.broadcast %2 : vector<56x1xi1> to vector<56x256xi1>
    %36 = arith.andi %35, %34 : vector<56x256xi1>
    %c128_i32_16 = arith.constant 128 : i32
    %37 = vector.broadcast %c128_i32_16 : i32 to vector<56x256xi32>
    %38 = arith.cmpi sge, %29, %37 : vector<56x256xi32>
    %39 = vector.broadcast %5 : vector<56x1xi1> to vector<56x256xi1>
    %40 = arith.andi %39, %38 : vector<56x256xi1>
    %41 = arith.ori %36, %40 : vector<56x256xi1>
    %cst_17 = arith.constant 0.000000e+00 : f32
    %42 = vector.broadcast %cst_17 : f32 to vector<56x256xf32>
    %43 = arith.select %41, %42, %28 : vector<56x256xi1>, vector<56x256xf32>
    %c192 = arith.constant 192 : index
    %c0_18 = arith.constant 0 : index
    %44 = vector.load %arg3[%c192, %c0_18] : memref<448x256xbf16, #tpu.memory_space<vmem>>, vector<256x256xbf16>
    %45 = arith.truncf %43 : vector<56x256xf32> to vector<56x256xbf16>
    %cst_19 = arith.constant dense<0.000000e+00> : vector<56x256xf32>
    %46 = tpu.matmul %45, %44, %cst_19 {dimension_numbers = #tpu.dot_dimension_numbers<[1], [0], [0], [1], [0, 0, 1, 1], [], []>} : vector<56x256xbf16>, vector<256x256xbf16>, vector<56x256xf32> -> vector<56x256xf32>
    %c1_20 = arith.constant 1 : index
    %c0_21 = arith.constant 0 : index
    %47 = vector.load %arg4[%c1_20, %c0_21] : memref<3x256xf32, #tpu.memory_space<vmem>>, vector<1x256xf32>
    %48 = vector.broadcast %47 : vector<1x256xf32> to vector<56x256xf32>
    %49 = arith.addf %46, %48 : vector<56x256xf32>
    %cst_22 = arith.constant 0.000000e+00 : f32
    %50 = vector.broadcast %cst_22 : f32 to vector<56x256xf32>
    %51 = arith.maximumf %49, %50 : vector<56x256xf32>
    %c256 = arith.constant 256 : index
    %c0_23 = arith.constant 0 : index
    %52 = vector.load %arg2[%c256, %c0_23] : memref<512x192xbf16, #tpu.memory_space<vmem>>, vector<256x128xbf16>
    %53 = arith.truncf %51 : vector<56x256xf32> to vector<56x256xbf16>
    %cst_24 = arith.constant dense<0.000000e+00> : vector<56x128xf32>
    %54 = tpu.matmul %53, %52, %cst_24 {dimension_numbers = #tpu.dot_dimension_numbers<[1], [0], [0], [1], [0, 0, 1, 1], [], []>} : vector<56x256xbf16>, vector<256x128xbf16>, vector<56x128xf32> -> vector<56x128xf32>
    %c2 = arith.constant 2 : index
    %c0_25 = arith.constant 0 : index
    %55 = vector.load %arg4[%c2, %c0_25] : memref<3x256xf32, #tpu.memory_space<vmem>>, vector<1x128xf32>
    %56 = vector.broadcast %55 : vector<1x128xf32> to vector<56x128xf32>
    %57 = arith.addf %54, %56 : vector<56x128xf32>
    %c0_26 = arith.constant 0 : index
    %c0_27 = arith.constant 0 : index
    %58 = vector.load %arg6[%c0_26, %c0_27] : memref<56x128xf32, #tpu.memory_space<vmem>>, vector<56x128xf32>
    tpu.vector_store %arg6[%c0_26, %c0_27], %57 {strides = array<i32>} : memref<56x128xf32, #tpu.memory_space<vmem>>, vector<56x128xf32>,
    return
  }
  func.func @transform_0(%arg0: i32) -> (i32, i32) {
    %c0_i32 = arith.constant 0 : i32
    %c0_i32_0 = arith.constant 0 : i32
    %c0_i32_1 = arith.constant 0 : i32
    return %c0_i32, %c0_i32_0 : i32, i32
  }
  func.func @transform_1(%arg0: i32) -> (i32, i32) {
    %c0_i32 = arith.constant 0 : i32
    %c0_i32_0 = arith.constant 0 : i32
    %c0_i32_1 = arith.constant 0 : i32
    return %c0_i32, %c0_i32_0 : i32, i32
  }
  func.func @transform_2(%arg0: i32) -> (i32, i32) {
    %c0_i32 = arith.constant 0 : i32
    %c0_i32_0 = arith.constant 0 : i32
    %c0_i32_1 = arith.constant 0 : i32
    return %c0_i32, %c0_i32_0 : i32, i32
  }
  func.func @transform_3(%arg0: i32) -> (i32, i32) {
    %c0_i32 = arith.constant 0 : i32
    %c0_i32_0 = arith.constant 0 : i32
    %c0_i32_1 = arith.constant 0 : i32
    return %c0_i32, %c0_i32_0 : i32, i32
  }
  func.func @transform_4(%arg0: i32) -> (i32, i32) {
    %c0_i32 = arith.constant 0 : i32
    %c0_i32_0 = arith.constant 0 : i32
    %c0_i32_1 = arith.constant 0 : i32
    return %c0_i32, %c0_i32_0 : i32, i32
  }
  func.func @transform_5(%arg0: i32) -> (i32, i32) {
    %c0_i32 = arith.constant 0 : i32
    %c0_i32_0 = arith.constant 0 : i32
    %c0_i32_1 = arith.constant 0 : i32
    return %c0_i32, %c0_i32_0 : i32, i32
  }
}

</mosaic_0001>

<llo_original>
// kernel: decoder_blue_forward.1
$region0: #{decoder_blue_forward.1}
  #allocation0 [shape = 'u32[]', space=smem, size = 0x4, offset = 0x4, fixed_abs, tag = 'smem constant byte address 0x4 - core index']
  #allocation1 [shape = 'u32[144,128]{1,0:T(1,128)}', space=vmem, size = 0x12000, scoped, tag = 'internal scratch']
  %s0 = inlined_call_operand.vmem [shape: bf16[56,256], index: 0, kind: input, shape index: {}]
  %s1 = inlined_call_operand.vmem [shape: bf16[512,192], index: 1, kind: input, shape index: {}]
  %s2 = inlined_call_operand.vmem [shape: bf16[448,256], index: 2, kind: input, shape index: {}]
  %s3 = inlined_call_operand.vmem [shape: f32[3,256], index: 3, kind: input, shape index: {}]
  %s4 = inlined_call_operand.vmem [shape: f32[56,2], index: 4, kind: input, shape index: {}]
  %s5 = inlined_call_operand.vmem [shape: f32[56,128], index: 5, kind: output, shape index: {}]
  %s6 = sld [smem:[#allocation0]]
  $region30: #{decoder_blue_forward.1} parent=0
    _
  %s8 = ssub.s32 1, %s6
  %s9 = scalar_select 0, %s8, %s6
  // Predicated region
  $region2: #{decoder_blue_forward.1} parent=0 // pred_check
    _
  $region3: #{decoder_blue_forward.1} parent=0 // pred_check_branch
    %11 = sbr.rel (0) target = $region5
  $region4: #{decoder_blue_forward.1} parent=0 // pred_region
    _
  $region5: #{decoder_blue_forward.1} parent=0 // pred_fallthru
    _
  // Predicated region
  $region6: #{decoder_blue_forward.1} parent=0 // pred_check
    _
  $region7: #{decoder_blue_forward.1} parent=0 // pred_check_branch
    %13 = sbr.rel (0) target = $region9
  $region8: #{decoder_blue_forward.1} parent=0 // pred_region
    _
  $region9: #{decoder_blue_forward.1} parent=0 // pred_fallthru
    _
  // Predicated region
  $region10: #{decoder_blue_forward.1} parent=0 // pred_check
    _
  $region11: #{decoder_blue_forward.1} parent=0 // pred_check_branch
    %15 = sbr.rel (0) target = $region13
  $region12: #{decoder_blue_forward.1} parent=0 // pred_region
    _
  $region13: #{decoder_blue_forward.1} parent=0 // pred_fallthru
    _
  // Predicated region
  $region14: #{decoder_blue_forward.1} parent=0 // pred_check
    _
  $region15: #{decoder_blue_forward.1} parent=0 // pred_check_branch
    %17 = sbr.rel (0) target = $region17
  $region16: #{decoder_blue_forward.1} parent=0 // pred_region
    _
  $region17: #{decoder_blue_forward.1} parent=0 // pred_fallthru
    _
  // Predicated region
  $region18: #{decoder_blue_forward.1} parent=0 // pred_check
    _
  $region19: #{decoder_blue_forward.1} parent=0 // pred_check_branch
    %19 = sbr.rel (0) target = $region21
  $region20: #{decoder_blue_forward.1} parent=0 // pred_region
    _
  $region21: #{decoder_blue_forward.1} parent=0 // pred_fallthru
    _
  %v21 = vld [vmem:[%s4] sm:$0xff]
  %v22 = vld [vmem:[%s4 + $0x8] sm:$0xff]
  %v23 = vld [vmem:[%s4 + $0x10] sm:$0xff]
  %v24 = vld [vmem:[%s4 + $0x18] sm:$0xff]
  %v25 = vld [vmem:[%s4 + $0x20] sm:$0xff]
  %v26 = vld [vmem:[%s4 + $0x28] sm:$0xff]
  %v27 = vld [vmem:[%s4 + $0x30] sm:$0xff]
  %vm28 = vcmp.gt.f32.partialorder %v21, 0.5
  %vm29 = vcmp.gt.f32.partialorder %v22, 0.5
  %vm30 = vcmp.gt.f32.partialorder %v23, 0.5
  %vm31 = vcmp.gt.f32.partialorder %v24, 0.5
  %vm32 = vcmp.gt.f32.partialorder %v25, 0.5
  %vm33 = vcmp.gt.f32.partialorder %v26, 0.5
  %vm34 = vcmp.gt.f32.partialorder %v27, 0.5
  %v35 = vld [vmem:[%s0] sm:$0xff]
  %v36 = vld [vmem:[%s0 + $0x8] sm:$0xff]
  %v37 = vld [vmem:[%s0 + $0x10] sm:$0xff]
  %v38 = vld [vmem:[%s0 + $0x18] sm:$0xff]
  %v39 = vld [vmem:[%s0 + $0x20] sm:$0xff]
  %v40 = vld [vmem:[%s0 + $0x28] sm:$0xff]
  %v41 = vld [vmem:[%s0 + $0x30] sm:$0xff]
  %v42 = vld [vmem:[%s1] sm:$0xff]
  %v43 = vld [vmem:[%s1 + $0x8] sm:$0xff]
  %v44 = vld [vmem:[%s1 + $0x10] sm:$0xff]
  %v45 = vld [vmem:[%s1 + $0x18] sm:$0xff]
  %v46 = vld [vmem:[%s1 + $0x20] sm:$0xff]
  %v47 = vld [vmem:[%s1 + $0x28] sm:$0xff]
  %v48 = vld [vmem:[%s1 + $0x30] sm:$0xff]
  %v49 = vld [vmem:[%s1 + $0x38] sm:$0xff]
  %v50 = vld [vmem:[%s1 + $0x40] sm:$0xff]
  %v51 = vld [vmem:[%s1 + $0x48] sm:$0xff]
  %v52 = vld [vmem:[%s1 + $0x50] sm:$0xff]
  %v53 = vld [vmem:[%s1 + $0x58] sm:$0xff]
  %v54 = vld [vmem:[%s1 + $0x60] sm:$0xff]
  %v55 = vld [vmem:[%s1 + $0x68] sm:$0xff]
  %v56 = vld [vmem:[%s1 + $0x70] sm:$0xff]
  %v57 = vld [vmem:[%s1 + $0x78] sm:$0xff]
  %v58 = vld [vmem:[%s1 + $0x80] sm:$0xff]
  %v59 = vld [vmem:[%s1 + $0x88] sm:$0xff]
  %v60 = vld [vmem:[%s1 + $0x90] sm:$0xff]
  %v61 = vld [vmem:[%s1 + $0x98] sm:$0xff]
  %v62 = vld [vmem:[%s1 + $0xa0] sm:$0xff]
  %v63 = vld [vmem:[%s1 + $0xa8] sm:$0xff]
  %v64 = vld [vmem:[%s1 + $0xb0] sm:$0xff]
  %v65 = vld [vmem:[%s1 + $0xb8] sm:$0xff]
  %v66 = vld [vmem:[%s1 + $0xc0] sm:$0xff]
  %v67 = vld [vmem:[%s1 + $0xc8] sm:$0xff]
  %v68 = vld [vmem:[%s1 + $0xd0] sm:$0xff]
  %v69 = vld [vmem:[%s1 + $0xd8] sm:$0xff]
  %v70 = vld [vmem:[%s1 + $0xe0] sm:$0xff]
  %v71 = vld [vmem:[%s1 + $0xe8] sm:$0xff]
  %v72 = vld [vmem:[%s1 + $0xf0] sm:$0xff]
  %v73 = vld [vmem:[%s1 + $0xf8] sm:$0xff]
  %v81 = vunpack.c.l.b16 %v35
  %v82 = vunpack.c.h.b16 %v35
  %v83 = vunpack.c.l.b16 %v36
  %v84 = vunpack.c.h.b16 %v36
  %v85 = vunpack.c.l.b16 %v37
  %v86 = vunpack.c.h.b16 %v37
  %v87 = vunpack.c.l.b16 %v38
  %v88 = vunpack.c.h.b16 %v38
  %v89 = vunpack.c.l.b16 %v39
  %v90 = vunpack.c.h.b16 %v39
  %v91 = vunpack.c.l.b16 %v40
  %v92 = vunpack.c.h.b16 %v40
  %v93 = vunpack.c.l.b16 %v41
  %v94 = vunpack.c.h.b16 %v41
  %v95 = vpack.c.b16 %v83, %v81
  %v96 = vpack.c.b16 %v84, %v82
  %v97 = vpack.c.b16 %v87, %v85
  %v98 = vpack.c.b16 %v88, %v86
  %v99 = vpack.c.b16 %v91, %v89
  %v100 = vpack.c.b16 %v92, %v90
  %v101 = vpack.c.b16 %v93, %v93
  %v102 = vpack.c.b16 %v94, %v94
  %v143 = vunpack.c.l.b16 %v42
  %v144 = vunpack.c.h.b16 %v42
  %v145 = vunpack.c.l.b16 %v43
  %v146 = vunpack.c.h.b16 %v43
  %v147 = vunpack.c.l.b16 %v44
  %v148 = vunpack.c.h.b16 %v44
  %v149 = vunpack.c.l.b16 %v45
  %v150 = vunpack.c.h.b16 %v45
  %v151 = vunpack.c.l.b16 %v46
  %v152 = vunpack.c.h.b16 %v46
  %v153 = vunpack.c.l.b16 %v47
  %v154 = vunpack.c.h.b16 %v47
  %v155 = vunpack.c.l.b16 %v48
  %v156 = vunpack.c.h.b16 %v48
  %v157 = vunpack.c.l.b16 %v49
  %v158 = vunpack.c.h.b16 %v49
  %v159 = vunpack.c.l.b16 %v50
  %v160 = vunpack.c.h.b16 %v50
  %v161 = vunpack.c.l.b16 %v51
  %v162 = vunpack.c.h.b16 %v51
  %v163 = vunpack.c.l.b16 %v52
  %v164 = vunpack.c.h.b16 %v52
  %v165 = vunpack.c.l.b16 %v53
  %v166 = vunpack.c.h.b16 %v53
  %v167 = vunpack.c.l.b16 %v54
  %v168 = vunpack.c.h.b16 %v54
  %v169 = vunpack.c.l.b16 %v55
  %v170 = vunpack.c.h.b16 %v55
  %v171 = vunpack.c.l.b16 %v56
  %v172 = vunpack.c.h.b16 %v56
  %v173 = vunpack.c.l.b16 %v57
  %v174 = vunpack.c.h.b16 %v57
  %v175 = vunpack.c.l.b16 %v58
  %v176 = vunpack.c.h.b16 %v58
  %v177 = vunpack.c.l.b16 %v59
  %v178 = vunpack.c.h.b16 %v59
  %v179 = vunpack.c.l.b16 %v60
  %v180 = vunpack.c.h.b16 %v60
  %v181 = vunpack.c.l.b16 %v61
  %v182 = vunpack.c.h.b16 %v61
  %v183 = vunpack.c.l.b16 %v62
  %v184 = vunpack.c.h.b16 %v62
  %v185 = vunpack.c.l.b16 %v63
  %v186 = vunpack.c.h.b16 %v63
  %v187 = vunpack.c.l.b16 %v64
  %v188 = vunpack.c.h.b16 %v64
  %v189 = vunpack.c.l.b16 %v65
  %v190 = vunpack.c.h.b16 %v65
  %v191 = vunpack.c.l.b16 %v66
  %v192 = vunpack.c.h.b16 %v66
  %v193 = vunpack.c.l.b16 %v67
  %v194 = vunpack.c.h.b16 %v67
  %v195 = vunpack.c.l.b16 %v68
  %v196 = vunpack.c.h.b16 %v68
  %v197 = vunpack.c.l.b16 %v69
  %v198 = vunpack.c.h.b16 %v69
  %v199 = vunpack.c.l.b16 %v70
  %v200 = vunpack.c.h.b16 %v70
  %v201 = vunpack.c.l.b16 %v71
  %v202 = vunpack.c.h.b16 %v71
  %v203 = vunpack.c.l.b16 %v72
  %v204 = vunpack.c.h.b16 %v72
  %v205 = vunpack.c.l.b16 %v73
  %v206 = vunpack.c.h.b16 %v73
  %v207 = vpack.c.b16 %v145, %v143
  %v208 = vpack.c.b16 %v146, %v144
  %v209 = vpack.c.b16 %v149, %v147
  %v210 = vpack.c.b16 %v150, %v148
  %v211 = vpack.c.b16 %v153, %v151
  %v212 = vpack.c.b16 %v154, %v152
  %v213 = vpack.c.b16 %v157, %v155
  %v214 = vpack.c.b16 %v158, %v156
  %v215 = vpack.c.b16 %v161, %v159
  %v216 = vpack.c.b16 %v162, %v160
  %v217 = vpack.c.b16 %v165, %v163
  %v218 = vpack.c.b16 %v166, %v164
  %v219 = vpack.c.b16 %v169, %v167
  %v220 = vpack.c.b16 %v170, %v168
  %v221 = vpack.c.b16 %v173, %v171
  %v222 = vpack.c.b16 %v174, %v172
  %v223 = vpack.c.b16 %v177, %v175
  %v224 = vpack.c.b16 %v178, %v176
  %v225 = vpack.c.b16 %v181, %v179
  %v226 = vpack.c.b16 %v182, %v180
  %v227 = vpack.c.b16 %v185, %v183
  %v228 = vpack.c.b16 %v186, %v184
  %v229 = vpack.c.b16 %v189, %v187
  %v230 = vpack.c.b16 %v190, %v188
  %v231 = vpack.c.b16 %v193, %v191
  %v232 = vpack.c.b16 %v194, %v192
  %v233 = vpack.c.b16 %v197, %v195
  %v234 = vpack.c.b16 %v198, %v196
  %v235 = vpack.c.b16 %v201, %v199
  %v236 = vpack.c.b16 %v202, %v200
  %v237 = vpack.c.b16 %v205, %v203
  %v238 = vpack.c.b16 %v206, %v204
  %271 = vmatprep.subr.bf16.mxu0 %v222
  %272 = vmatpush1.bf16.msra.mxu0 %v221
  %273 = vmatprep.subr.bf16.mxu0 %v220
  %274 = vmatpush1.bf16.msra.mxu0 %v219
  %275 = vmatprep.subr.bf16.mxu0 %v218
  %276 = vmatpush1.bf16.msra.mxu0 %v217
  %277 = vmatprep.subr.bf16.mxu0 %v216
  %278 = vmatpush1.bf16.msra.mxu0 %v215
  %279 = vmatprep.subr.bf16.mxu0 %v214
  %280 = vmatpush1.bf16.msra.mxu0 %v213
  %281 = vmatprep.subr.bf16.mxu0 %v212
  %282 = vmatpush1.bf16.msra.mxu0 %v211
  %283 = vmatprep.subr.bf16.mxu0 %v210
  %284 = vmatpush1.bf16.msra.mxu0 %v209
  %285 = vmatprep.subr.bf16.mxu0 %v208
  %286 = vmatpush1.bf16.msra.mxu0 %v207
  %287 = vmatprep.subr.bf16.mxu0 %v238
  %288 = vmatpush2.bf16.msra.mxu0 %v237
  %289 = vmatprep.subr.bf16.mxu0 %v236
  %290 = vmatpush2.bf16.msra.mxu0 %v235
  %291 = vmatprep.subr.bf16.mxu0 %v234
  %292 = vmatpush2.bf16.msra.mxu0 %v233
  %293 = vmatprep.subr.bf16.mxu0 %v232
  %294 = vmatpush2.bf16.msra.mxu0 %v231
  %295 = vmatprep.subr.bf16.mxu0 %v230
  %296 = vmatpush2.bf16.msra.mxu0 %v229
  %297 = vmatprep.subr.bf16.mxu0 %v228
  %298 = vmatpush2.bf16.msra.mxu0 %v227
  %299 = vmatprep.subr.bf16.mxu0 %v226
  %300 = vmatpush2.bf16.msra.mxu0 %v225
  %301 = vmatprep.subr.bf16.mxu0 %v224
  %302 = vmatpush2.bf16.msra.mxu0 %v223
  %303 = vmatprep.mubr.bf16.mxu0 %v96
  %304 = vmatmul.mubr.bf16.gmra.mxu0 %v95
  %v305 = vpop.f32.mrf.mxu0
  %v306 = vadd.f32 0.0, %v305
  %v307 = vpop.f32.mrf.mxu0
  %v308 = vadd.f32 0.0, %v307
  %v309 = vpop.f32.mrf.mxu0
  %v310 = vadd.f32 0.0, %v309
  %v311 = vpop.f32.mrf.mxu0
  %v312 = vadd.f32 0.0, %v311
  %313 = vmatprep.mubr.bf16.mxu0 %v98
  %314 = vmatmul.mubr.bf16.gmra.mxu0 %v97
  %v315 = vpop.f32.mrf.mxu0
  %v316 = vadd.f32 0.0, %v315
  %v317 = vpop.f32.mrf.mxu0
  %v318 = vadd.f32 0.0, %v317
  %v319 = vpop.f32.mrf.mxu0
  %v320 = vadd.f32 0.0, %v319
  %v321 = vpop.f32.mrf.mxu0
  %v322 = vadd.f32 0.0, %v321
  %323 = vmatprep.mubr.bf16.mxu0 %v100
  %324 = vmatmul.mubr.bf16.gmra.mxu0 %v99
  %v325 = vpop.f32.mrf.mxu0
  %v326 = vadd.f32 0.0, %v325
  %v327 = vpop.f32.mrf.mxu0
  %v328 = vadd.f32 0.0, %v327
  %v329 = vpop.f32.mrf.mxu0
  %v330 = vadd.f32 0.0, %v329
  %v331 = vpop.f32.mrf.mxu0
  %v332 = vadd.f32 0.0, %v331
  %333 = vmatprep.mubr.bf16.mxu0 %v102
  %334 = vmatmul.mubr.bf16.gmra.mxu0 %v101
  %v335 = vpop.f32.mrf.mxu0
  %v336 = vadd.f32 0.0, %v335
  %v337 = vpop.f32.mrf.mxu0
  %v338 = vadd.f32 0.0, %v337
  %v339 = vpop.f32.mrf.mxu0
  %v340 = vpop.f32.mrf.mxu0
  %341 = vdwg.mxu0
  %v342 = vmax.f32 %v306, 0.0
  %v343 = vmax.f32 %v308, 0.0
  %v344 = vmax.f32 %v310, 0.0
  %v345 = vmax.f32 %v312, 0.0
  %v346 = vmax.f32 %v316, 0.0
  %v347 = vmax.f32 %v318, 0.0
  %v348 = vmax.f32 %v320, 0.0
  %v349 = vmax.f32 %v322, 0.0
  %v350 = vmax.f32 %v326, 0.0
  %v351 = vmax.f32 %v328, 0.0
  %v352 = vmax.f32 %v330, 0.0
  %v353 = vmax.f32 %v332, 0.0
  %v354 = vmax.f32 %v336, 0.0
  %v355 = vmax.f32 %v338, 0.0
  %v356 = vlaneseq
  %v357 = vand.u32 %v356, 127
  %v358 = vadd.s32 %v357, 128
  %vm359 = vcmp.ge.s32.totalorder %v357, 48
  %vm360 = vcmp.ge.s32.totalorder %v358, 48
  %vm361 = vcmp.lt.s32.totalorder %v357, 64
  %vm362 = vcmp.lt.s32.totalorder %v358, 64
  %vm363 = vmand %vm359, %vm361
  %vm364 = vmand %vm360, %vm362
  %v365 = vsel %vm28, 1, 0
  %v366 = vsel %vm29, 1, 0
  %v367 = vsel %vm30, 1, 0
  %v368 = vsel %vm31, 1, 0
  %v369 = vsel %vm32, 1, 0
  %v370 = vsel %vm33, 1, 0
  %v371 = vsel %vm34, 1, 0
  %372 = vset.pattern.permute.xlu0 0
  %373 = vperm.xlu0 %372, %v365
  %v374 = vpop.permute.xlu0 %373
  %375 = vset.pattern.permute.xlu0 0
  %376 = vperm.xlu0 %375, %v366
  %v377 = vpop.permute.xlu0 %376
  %378 = vset.pattern.permute.xlu0 0
  %379 = vperm.xlu0 %378, %v367
  %v380 = vpop.permute.xlu0 %379
  %381 = vset.pattern.permute.xlu0 0
  %382 = vperm.xlu0 %381, %v368
  %v383 = vpop.permute.xlu0 %382
  %384 = vset.pattern.permute.xlu0 0
  %385 = vperm.xlu0 %384, %v369
  %v386 = vpop.permute.xlu0 %385
  %387 = vset.pattern.permute.xlu0 0
  %388 = vperm.xlu0 %387, %v370
  %v389 = vpop.permute.xlu0 %388
  %390 = vset.pattern.permute.xlu0 0
  %391 = vperm.xlu0 %390, %v371
  %v392 = vpop.permute.xlu0 %391
  %vm393 = vcmp.eq.s32.totalorder %v374, 1
  %vm394 = vcmp.eq.s32.totalorder %v377, 1
  %vm395 = vcmp.eq.s32.totalorder %v380, 1
  %vm396 = vcmp.eq.s32.totalorder %v383, 1
  %vm397 = vcmp.eq.s32.totalorder %v386, 1
  %vm398 = vcmp.eq.s32.totalorder %v389, 1
  %vm399 = vcmp.eq.s32.totalorder %v392, 1
  %vm400 = vmand %vm393, %vm363
  %vm401 = vmand %vm393, %vm364
  %vm402 = vmand %vm394, %vm363
  %vm403 = vmand %vm394, %vm364
  %vm404 = vmand %vm395, %vm363
  %vm405 = vmand %vm395, %vm364
  %vm406 = vmand %vm396, %vm363
  %vm407 = vmand %vm396, %vm364
  %vm408 = vmand %vm397, %vm363
  %vm409 = vmand %vm397, %vm364
  %vm410 = vmand %vm398, %vm363
  %vm411 = vmand %vm398, %vm364
  %vm412 = vmand %vm399, %vm363
  %vm413 = vmand %vm399, %vm364
  %v414 = vsel %vm400, 0.0, %v342
  %v415 = vsel %vm401, 0.0, %v343
  %v416 = vsel %vm402, 0.0, %v344
  %v417 = vsel %vm403, 0.0, %v345
  %v418 = vsel %vm404, 0.0, %v346
  %v419 = vsel %vm405, 0.0, %v347
  %v420 = vsel %vm406, 0.0, %v348
  %v421 = vsel %vm407, 0.0, %v349
  %v422 = vsel %vm408, 0.0, %v350
  %v423 = vsel %vm409, 0.0, %v351
  %v424 = vsel %vm410, 0.0, %v352
  %v425 = vsel %vm411, 0.0, %v353
  %v426 = vsel %vm412, 0.0, %v354
  %v427 = vsel %vm413, 0.0, %v355
  %v428 = vld [vmem:[%s2] sm:$0xff]
  %v429 = vld [vmem:[%s2 + $0x8] sm:$0xff]
  %v430 = vld [vmem:[%s2 + $0x10] sm:$0xff]
  %v431 = vld [vmem:[%s2 + $0x18] sm:$0xff]
  %v432 = vld [vmem:[%s2 + $0x20] sm:$0xff]
  %v433 = vld [vmem:[%s2 + $0x28] sm:$0xff]
  %v434 = vld [vmem:[%s2 + $0x30] sm:$0xff]
  %v435 = vld [vmem:[%s2 + $0x38] sm:$0xff]
  %v436 = vld [vmem:[%s2 + $0x40] sm:$0xff]
  %v437 = vld [vmem:[%s2 + $0x48] sm:$0xff]
  %v438 = vld [vmem:[%s2 + $0x50] sm:$0xff]
  %v439 = vld [vmem:[%s2 + $0x58] sm:$0xff]
  %v440 = vld [vmem:[%s2 + $0x60] sm:$0xff]
  %v441 = vld [vmem:[%s2 + $0x68] sm:$0xff]
  %v442 = vld [vmem:[%s2 + $0x70] sm:$0xff]
  %v443 = vld [vmem:[%s2 + $0x78] sm:$0xff]
  %v444 = vld [vmem:[%s2 + $0x80] sm:$0xff]
  %v445 = vld [vmem:[%s2 + $0x88] sm:$0xff]
  %v446 = vld [vmem:[%s2 + $0x90] sm:$0xff]
  %v447 = vld [vmem:[%s2 + $0x98] sm:$0xff]
  %v448 = vld [vmem:[%s2 + $0xa0] sm:$0xff]
  %v449 = vld [vmem:[%s2 + $0xa8] sm:$0xff]
  %v450 = vld [vmem:[%s2 + $0xb0] sm:$0xff]
  %v451 = vld [vmem:[%s2 + $0xb8] sm:$0xff]
  %v452 = vpack.c.bf16 %v416, %v414
  %v453 = vpack.c.bf16 %v417, %v415
  %v454 = vpack.c.bf16 %v420, %v418
  %v455 = vpack.c.bf16 %v421, %v419
  %v456 = vpack.c.bf16 %v424, %v422
  %v457 = vpack.c.bf16 %v425, %v423
  %v458 = vpack.c.bf16 %v426, %v426
  %v459 = vpack.c.bf16 %v427, %v427
  %v460 = vld [vmem:[%s3] ss:$4 sm:$0x3]
  %v462 = vlaneseq
  %v463 = vshrl.u32 %v462, 7
  %v464 = vsub.s32 0, %v463
  %v465 = vrot.slane %v460, %v464
  %v466 = vlaneseq
  %v467 = vshrl.u32 %v466, 7
  %v468 = vsub.s32 1, %v467
  %v469 = vrot.slane %v460, %v468
  %v496 = vunpack.c.l.b16 %v428
  %v497 = vunpack.c.h.b16 %v428
  %v498 = vunpack.c.l.b16 %v429
  %v499 = vunpack.c.h.b16 %v429
  %v500 = vunpack.c.l.b16 %v430
  %v501 = vunpack.c.h.b16 %v430
  %v502 = vunpack.c.l.b16 %v431
  %v503 = vunpack.c.h.b16 %v431
  %v504 = vunpack.c.l.b16 %v432
  %v505 = vunpack.c.h.b16 %v432
  %v506 = vunpack.c.l.b16 %v433
  %v507 = vunpack.c.h.b16 %v433
  %v508 = vunpack.c.l.b16 %v434
  %v509 = vunpack.c.h.b16 %v434
  %v510 = vunpack.c.l.b16 %v435
  %v511 = vunpack.c.h.b16 %v435
  %v512 = vunpack.c.l.b16 %v436
  %v513 = vunpack.c.h.b16 %v436
  %v514 = vunpack.c.l.b16 %v437
  %v515 = vunpack.c.h.b16 %v437
  %v516 = vunpack.c.l.b16 %v438
  %v517 = vunpack.c.h.b16 %v438
  %v518 = vunpack.c.l.b16 %v439
  %v519 = vunpack.c.h.b16 %v439
  %v520 = vunpack.c.l.b16 %v440
  %v521 = vunpack.c.h.b16 %v440
  %v522 = vunpack.c.l.b16 %v441
  %v523 = vunpack.c.h.b16 %v441
  %v524 = vunpack.c.l.b16 %v442
  %v525 = vunpack.c.h.b16 %v442
  %v526 = vunpack.c.l.b16 %v443
  %v527 = vunpack.c.h.b16 %v443
  %v528 = vunpack.c.l.b16 %v444
  %v529 = vunpack.c.h.b16 %v444
  %v530 = vunpack.c.l.b16 %v445
  %v531 = vunpack.c.h.b16 %v445
  %v532 = vunpack.c.l.b16 %v446
  %v533 = vunpack.c.h.b16 %v446
  %v534 = vunpack.c.l.b16 %v447
  %v535 = vunpack.c.h.b16 %v447
  %v536 = vunpack.c.l.b16 %v448
  %v537 = vunpack.c.h.b16 %v448
  %v538 = vunpack.c.l.b16 %v449
  %v539 = vunpack.c.h.b16 %v449
  %v540 = vunpack.c.l.b16 %v450
  %v541 = vunpack.c.h.b16 %v450
  %v542 = vunpack.c.l.b16 %v451
  %v543 = vunpack.c.h.b16 %v451
  %v544 = vpack.c.b16 %v498, %v496
  %v545 = vpack.c.b16 %v499, %v497
  %v546 = vpack.c.b16 %v502, %v500
  %v547 = vpack.c.b16 %v503, %v501
  %v548 = vpack.c.b16 %v506, %v504
  %v549 = vpack.c.b16 %v507, %v505
  %v550 = vpack.c.b16 %v510, %v508
  %v551 = vpack.c.b16 %v511, %v509
  %v552 = vpack.c.b16 %v514, %v512
  %v553 = vpack.c.b16 %v515, %v513
  %v554 = vpack.c.b16 %v518, %v516
  %v555 = vpack.c.b16 %v519, %v517
  %v556 = vpack.c.b16 %v522, %v520
  %v557 = vpack.c.b16 %v523, %v521
  %v558 = vpack.c.b16 %v526, %v524
  %v559 = vpack.c.b16 %v527, %v525
  %v560 = vpack.c.b16 %v530, %v528
  %v561 = vpack.c.b16 %v531, %v529
  %v562 = vpack.c.b16 %v534, %v532
  %v563 = vpack.c.b16 %v535, %v533
  %v564 = vpack.c.b16 %v538, %v536
  %v565 = vpack.c.b16 %v539, %v537
  %v566 = vpack.c.b16 %v542, %v540
  %v567 = vpack.c.b16 %v543, %v541
  %vm592 = vcmask 523264
  %v594 = vsel %vm592, %v453, 0
  %v597 = vsel %vm592, %v455, 0
  %v600 = vsel %vm592, %v457, 0
  %v603 = vsel %vm592, %v459, 0
  %605 = vmatprep.subr.bf16.mxu0 %v559
  %606 = vmatpush1.bf16.msra.mxu0 %v558
  %607 = vmatprep.subr.bf16.mxu0 %v557
  %608 = vmatpush1.bf16.msra.mxu0 %v556
  %609 = vmatprep.subr.bf16.mxu0 %v555
  %610 = vmatpush1.bf16.msra.mxu0 %v554
  %611 = vmatprep.subr.bf16.mxu0 %v553
  %612 = vmatpush1.bf16.msra.mxu0 %v552
  %613 = vmatprep.subr.bf16.mxu0 %v551
  %614 = vmatpush1.bf16.msra.mxu0 %v550
  %615 = vmatprep.subr.bf16.mxu0 %v549
  %616 = vmatpush1.bf16.msra.mxu0 %v548
  %617 = vmatprep.subr.bf16.mxu0 %v547
  %618 = vmatpush1.bf16.msra.mxu0 %v546
  %619 = vmatprep.subr.bf16.mxu0 %v545
  %620 = vmatpush1.bf16.msra.mxu0 %v544
  %621 = vmatprep.subr.bf16.mxu0 0
  %622 = vmatpush2.bf16.msra.mxu0 0
  %623 = vmatprep.subr.bf16.mxu0 0
  %624 = vmatpush2.bf16.msra.mxu0 0
  %625 = vmatprep.subr.bf16.mxu0 0
  %626 = vmatpush2.bf16.msra.mxu0 0
  %627 = vmatprep.subr.bf16.mxu0 0
  %628 = vmatpush2.bf16.msra.mxu0 0
  %629 = vmatprep.subr.bf16.mxu0 %v567
  %630 = vmatpush2.bf16.msra.mxu0 %v566
  %631 = vmatprep.subr.bf16.mxu0 %v565
  %632 = vmatpush2.bf16.msra.mxu0 %v564
  %633 = vmatprep.subr.bf16.mxu0 %v563
  %634 = vmatpush2.bf16.msra.mxu0 %v562
  %635 = vmatprep.subr.bf16.mxu0 %v561
  %636 = vmatpush2.bf16.msra.mxu0 %v560
  %637 = vmatprep.mubr.bf16.mxu0 %v594
  %638 = vmatmul.mubr.bf16.gmra.mxu0 %v452
  %v639 = vpop.f32.mrf.mxu0
  %v640 = vadd.f32 %v465, %v639
  %v641 = vpop.f32.mrf.mxu0
  %v642 = vadd.f32 %v469, %v641
  %v643 = vpop.f32.mrf.mxu0
  %v644 = vadd.f32 %v465, %v643
  %v645 = vpop.f32.mrf.mxu0
  %v646 = vadd.f32 %v469, %v645
  %647 = vmatprep.mubr.bf16.mxu0 %v597
  %648 = vmatmul.mubr.bf16.gmra.mxu0 %v454
  %v649 = vpop.f32.mrf.mxu0
  %v650 = vadd.f32 %v465, %v649
  %v651 = vpop.f32.mrf.mxu0
  %v652 = vadd.f32 %v469, %v651
  %v653 = vpop.f32.mrf.mxu0
  %v654 = vadd.f32 %v465, %v653
  %v655 = vpop.f32.mrf.mxu0
  %v656 = vadd.f32 %v469, %v655
  %657 = vmatprep.mubr.bf16.mxu0 %v600
  %658 = vmatmul.mubr.bf16.gmra.mxu0 %v456
  %v659 = vpop.f32.mrf.mxu0
  %v660 = vadd.f32 %v465, %v659
  %v661 = vpop.f32.mrf.mxu0
  %v662 = vadd.f32 %v469, %v661
  %v663 = vpop.f32.mrf.mxu0
  %v664 = vadd.f32 %v465, %v663
  %v665 = vpop.f32.mrf.mxu0
  %v666 = vadd.f32 %v469, %v665
  %667 = vmatprep.mubr.bf16.mxu0 %v603
  %668 = vmatmul.mubr.bf16.gmra.mxu0 %v458
  %v669 = vpop.f32.mrf.mxu0
  %v670 = vadd.f32 %v465, %v669
  %v671 = vpop.f32.mrf.mxu0
  %v672 = vadd.f32 %v469, %v671
  %v673 = vpop.f32.mrf.mxu0
  %v674 = vpop.f32.mrf.mxu0
  %675 = vdwg.mxu0
  %v676 = vmax.f32 %v640, 0.0
  %v677 = vmax.f32 %v642, 0.0
  %v678 = vmax.f32 %v644, 0.0
  %v679 = vmax.f32 %v646, 0.0
  %v680 = vmax.f32 %v650, 0.0
  %v681 = vmax.f32 %v652, 0.0
  %v682 = vmax.f32 %v654, 0.0
  %v683 = vmax.f32 %v656, 0.0
  %v684 = vmax.f32 %v660, 0.0
  %v685 = vmax.f32 %v662, 0.0
  %v686 = vmax.f32 %v664, 0.0
  %v687 = vmax.f32 %v666, 0.0
  %v688 = vmax.f32 %v670, 0.0
  %v689 = vmax.f32 %v672, 0.0
  %vm690 = vcmp.ge.s32.totalorder %v357, 120
  %vm691 = vcmp.ge.s32.totalorder %v358, 120
  %vm692 = vcmp.lt.s32.totalorder %v357, 128
  %vm693 = vcmp.lt.s32.totalorder %v358, 128
  %vm694 = vmand %vm690, %vm692
  %vm695 = vmand %vm691, %vm693
  %vm696 = vmand %vm393, %vm694
  %vm697 = vmand %vm393, %vm695
  %vm698 = vmand %vm394, %vm694
  %vm699 = vmand %vm394, %vm695
  %vm700 = vmand %vm395, %vm694
  %vm701 = vmand %vm395, %vm695
  %vm702 = vmand %vm396, %vm694
  %vm703 = vmand %vm396, %vm695
  %vm704 = vmand %vm397, %vm694
  %vm705 = vmand %vm397, %vm695
  %vm706 = vmand %vm398, %vm694
  %vm707 = vmand %vm398, %vm695
  %vm708 = vmand %vm399, %vm694
  %vm709 = vmand %vm399, %vm695
  %vm710 = vcmp.ge.s32.totalorder %v357, 128
  %vm711 = vcmp.ge.s32.totalorder %v358, 128
  %712 = vset.pattern.permute.xlu0 1
  %713 = vperm.xlu0 %712, %v365
  %v714 = vpop.permute.xlu0 %713
  %715 = vset.pattern.permute.xlu0 1
  %716 = vperm.xlu0 %715, %v366
  %v717 = vpop.permute.xlu0 %716
  %718 = vset.pattern.permute.xlu0 1
  %719 = vperm.xlu0 %718, %v367
  %v720 = vpop.permute.xlu0 %719
  %721 = vset.pattern.permute.xlu0 1
  %722 = vperm.xlu0 %721, %v368
  %v723 = vpop.permute.xlu0 %722
  %724 = vset.pattern.permute.xlu0 1
  %725 = vperm.xlu0 %724, %v369
  %v726 = vpop.permute.xlu0 %725
  %727 = vset.pattern.permute.xlu0 1
  %728 = vperm.xlu0 %727, %v370
  %v729 = vpop.permute.xlu0 %728
  %730 = vset.pattern.permute.xlu0 1
  %731 = vperm.xlu0 %730, %v371
  %v732 = vpop.permute.xlu0 %731
  %vm733 = vcmp.eq.s32.totalorder %v714, 1
  %vm734 = vcmp.eq.s32.totalorder %v717, 1
  %vm735 = vcmp.eq.s32.totalorder %v720, 1
  %vm736 = vcmp.eq.s32.totalorder %v723, 1
  %vm737 = vcmp.eq.s32.totalorder %v726, 1
  %vm738 = vcmp.eq.s32.totalorder %v729, 1
  %vm739 = vcmp.eq.s32.totalorder %v732, 1
  %vm740 = vmand %vm733, %vm710
  %vm741 = vmand %vm733, %vm711
  %vm742 = vmand %vm734, %vm710
  %vm743 = vmand %vm734, %vm711
  %vm744 = vmand %vm735, %vm710
  %vm745 = vmand %vm735, %vm711
  %vm746 = vmand %vm736, %vm710
  %vm747 = vmand %vm736, %vm711
  %vm748 = vmand %vm737, %vm710
  %vm749 = vmand %vm737, %vm711
  %vm750 = vmand %vm738, %vm710
  %vm751 = vmand %vm738, %vm711
  %vm752 = vmand %vm739, %vm710
  %vm753 = vmand %vm739, %vm711
  %vm754 = vmor %vm696, %vm740
  %vm755 = vmor %vm697, %vm741
  %vm756 = vmor %vm698, %vm742
  %vm757 = vmor %vm699, %vm743
  %vm758 = vmor %vm700, %vm744
  %vm759 = vmor %vm701, %vm745
  %vm760 = vmor %vm702, %vm746
  %vm761 = vmor %vm703, %vm747
  %vm762 = vmor %vm704, %vm748
  %vm763 = vmor %vm705, %vm749
  %vm764 = vmor %vm706, %vm750
  %vm765 = vmor %vm707, %vm751
  %vm766 = vmor %vm708, %vm752
  %vm767 = vmor %vm709, %vm753
  %v768 = vsel %vm754, 0.0, %v676
  %v769 = vsel %vm755, 0.0, %v677
  %v770 = vsel %vm756, 0.0, %v678
  %v771 = vsel %vm757, 0.0, %v679
  %v772 = vsel %vm758, 0.0, %v680
  %v773 = vsel %vm759, 0.0, %v681
  %v774 = vsel %vm760, 0.0, %v682
  %v775 = vsel %vm761, 0.0, %v683
  %v776 = vsel %vm762, 0.0, %v684
  %v777 = vsel %vm763, 0.0, %v685
  %v778 = vsel %vm764, 0.0, %v686
  %v779 = vsel %vm765, 0.0, %v687
  %v780 = vsel %vm766, 0.0, %v688
  %v781 = vsel %vm767, 0.0, %v689
  %v782 = vld [vmem:[%s2 + $0xc0] sm:$0xff]
  %v783 = vld [vmem:[%s2 + $0xc8] sm:$0xff]
  %v784 = vld [vmem:[%s2 + $0xd0] sm:$0xff]
  %v785 = vld [vmem:[%s2 + $0xd8] sm:$0xff]
  %v786 = vld [vmem:[%s2 + $0xe0] sm:$0xff]
  %v787 = vld [vmem:[%s2 + $0xe8] sm:$0xff]
  %v788 = vld [vmem:[%s2 + $0xf0] sm:$0xff]
  %v789 = vld [vmem:[%s2 + $0xf8] sm:$0xff]
  %v790 = vld [vmem:[%s2 + $0x100] sm:$0xff]
  %v791 = vld [vmem:[%s2 + $0x108] sm:$0xff]
  %v792 = vld [vmem:[%s2 + $0x110] sm:$0xff]
  %v793 = vld [vmem:[%s2 + $0x118] sm:$0xff]
  %v794 = vld [vmem:[%s2 + $0x120] sm:$0xff]
  %v795 = vld [vmem:[%s2 + $0x128] sm:$0xff]
  %v796 = vld [vmem:[%s2 + $0x130] sm:$0xff]
  %v797 = vld [vmem:[%s2 + $0x138] sm:$0xff]
  %v798 = vld [vmem:[%s2 + $0x140] sm:$0xff]
  %v799 = vld [vmem:[%s2 + $0x148] sm:$0xff]
  %v800 = vld [vmem:[%s2 + $0x150] sm:$0xff]
  %v801 = vld [vmem:[%s2 + $0x158] sm:$0xff]
  %v802 = vld [vmem:[%s2 + $0x160] sm:$0xff]
  %v803 = vld [vmem:[%s2 + $0x168] sm:$0xff]
  %v804 = vld [vmem:[%s2 + $0x170] sm:$0xff]
  %v805 = vld [vmem:[%s2 + $0x178] sm:$0xff]
  %v806 = vld [vmem:[%s2 + $0x180] sm:$0xff]
  %v807 = vld [vmem:[%s2 + $0x188] sm:$0xff]
  %v808 = vld [vmem:[%s2 + $0x190] sm:$0xff]
  %v809 = vld [vmem:[%s2 + $0x198] sm:$0xff]
  %v810 = vld [vmem:[%s2 + $0x1a0] sm:$0xff]
  %v811 = vld [vmem:[%s2 + $0x1a8] sm:$0xff]
  %v812 = vld [vmem:[%s2 + $0x1b0] sm:$0xff]
  %v813 = vld [vmem:[%s2 + $0x1b8] sm:$0xff]
  %v814 = vpack.c.bf16 %v770, %v768
  %v815 = vpack.c.bf16 %v771, %v769
  %v816 = vpack.c.bf16 %v774, %v772
  %v817 = vpack.c.bf16 %v775, %v773
  %v818 = vpack.c.bf16 %v778, %v776
  %v819 = vpack.c.bf16 %v779, %v777
  %v820 = vpack.c.bf16 %v780, %v780
  %v821 = vpack.c.bf16 %v781, %v781
  %s822 = scalar_lea.vmem %s3, 1
  %v823 = vld [vmem:[%s822] ss:$4 sm:$0x3]
  %v825 = vlaneseq
  %v826 = vshrl.u32 %v825, 7
  %v827 = vsub.s32 0, %v826
  %v828 = vrot.slane %v823, %v827
  %v829 = vlaneseq
  %v830 = vshrl.u32 %v829, 7
  %v831 = vsub.s32 1, %v830
  %v832 = vrot.slane %v823, %v831
  %v867 = vunpack.c.l.b16 %v782
  %v868 = vunpack.c.h.b16 %v782
  %v869 = vunpack.c.l.b16 %v783
  %v870 = vunpack.c.h.b16 %v783
  %v871 = vunpack.c.l.b16 %v784
  %v872 = vunpack.c.h.b16 %v784
  %v873 = vunpack.c.l.b16 %v785
  %v874 = vunpack.c.h.b16 %v785
  %v875 = vunpack.c.l.b16 %v786
  %v876 = vunpack.c.h.b16 %v786
  %v877 = vunpack.c.l.b16 %v787
  %v878 = vunpack.c.h.b16 %v787
  %v879 = vunpack.c.l.b16 %v788
  %v880 = vunpack.c.h.b16 %v788
  %v881 = vunpack.c.l.b16 %v789
  %v882 = vunpack.c.h.b16 %v789
  %v883 = vunpack.c.l.b16 %v790
  %v884 = vunpack.c.h.b16 %v790
  %v885 = vunpack.c.l.b16 %v791
  %v886 = vunpack.c.h.b16 %v791
  %v887 = vunpack.c.l.b16 %v792
  %v888 = vunpack.c.h.b16 %v792
  %v889 = vunpack.c.l.b16 %v793
  %v890 = vunpack.c.h.b16 %v793
  %v891 = vunpack.c.l.b16 %v794
  %v892 = vunpack.c.h.b16 %v794
  %v893 = vunpack.c.l.b16 %v795
  %v894 = vunpack.c.h.b16 %v795
  %v895 = vunpack.c.l.b16 %v796
  %v896 = vunpack.c.h.b16 %v796
  %v897 = vunpack.c.l.b16 %v797
  %v898 = vunpack.c.h.b16 %v797
  %v899 = vunpack.c.l.b16 %v798
  %v900 = vunpack.c.h.b16 %v798
  %v901 = vunpack.c.l.b16 %v799
  %v902 = vunpack.c.h.b16 %v799
  %v903 = vunpack.c.l.b16 %v800
  %v904 = vunpack.c.h.b16 %v800
  %v905 = vunpack.c.l.b16 %v801
  %v906 = vunpack.c.h.b16 %v801
  %v907 = vunpack.c.l.b16 %v802
  %v908 = vunpack.c.h.b16 %v802
  %v909 = vunpack.c.l.b16 %v803
  %v910 = vunpack.c.h.b16 %v803
  %v911 = vunpack.c.l.b16 %v804
  %v912 = vunpack.c.h.b16 %v804
  %v913 = vunpack.c.l.b16 %v805
  %v914 = vunpack.c.h.b16 %v805
  %v915 = vunpack.c.l.b16 %v806
  %v916 = vunpack.c.h.b16 %v806
  %v917 = vunpack.c.l.b16 %v807
  %v918 = vunpack.c.h.b16 %v807
  %v919 = vunpack.c.l.b16 %v808
  %v920 = vunpack.c.h.b16 %v808
  %v921 = vunpack.c.l.b16 %v809
  %v922 = vunpack.c.h.b16 %v809
  %v923 = vunpack.c.l.b16 %v810
  %v924 = vunpack.c.h.b16 %v810
  %v925 = vunpack.c.l.b16 %v811
  %v926 = vunpack.c.h.b16 %v811
  %v927 = vunpack.c.l.b16 %v812
  %v928 = vunpack.c.h.b16 %v812
  %v929 = vunpack.c.l.b16 %v813
  %v930 = vunpack.c.h.b16 %v813
  %v931 = vpack.c.b16 %v869, %v867
  %v932 = vpack.c.b16 %v870, %v868
  %v933 = vpack.c.b16 %v873, %v871
  %v934 = vpack.c.b16 %v874, %v872
  %v935 = vpack.c.b16 %v877, %v875
  %v936 = vpack.c.b16 %v878, %v876
  %v937 = vpack.c.b16 %v881, %v879
  %v938 = vpack.c.b16 %v882, %v880
  %v939 = vpack.c.b16 %v885, %v883
  %v940 = vpack.c.b16 %v886, %v884
  %v941 = vpack.c.b16 %v889, %v887
  %v942 = vpack.c.b16 %v890, %v888
  %v943 = vpack.c.b16 %v893, %v891
  %v944 = vpack.c.b16 %v894, %v892
  %v945 = vpack.c.b16 %v897, %v895
  %v946 = vpack.c.b16 %v898, %v896
  %v947 = vpack.c.b16 %v901, %v899
  %v948 = vpack.c.b16 %v902, %v900
  %v949 = vpack.c.b16 %v905, %v903
  %v950 = vpack.c.b16 %v906, %v904
  %v951 = vpack.c.b16 %v909, %v907
  %v952 = vpack.c.b16 %v910, %v908
  %v953 = vpack.c.b16 %v913, %v911
  %v954 = vpack.c.b16 %v914, %v912
  %v955 = vpack.c.b16 %v917, %v915
  %v956 = vpack.c.b16 %v918, %v916
  %v957 = vpack.c.b16 %v921, %v919
  %v958 = vpack.c.b16 %v922, %v920
  %v959 = vpack.c.b16 %v925, %v923
  %v960 = vpack.c.b16 %v926, %v924
  %v961 = vpack.c.b16 %v929, %v927
  %v962 = vpack.c.b16 %v930, %v928
  %995 = vmatprep.subr.bf16.mxu0 %v946
  %996 = vmatpush1.bf16.msra.mxu0 %v945
  %997 = vmatprep.subr.bf16.mxu0 %v944
  %998 = vmatpush1.bf16.msra.mxu0 %v943
  %999 = vmatprep.subr.bf16.mxu0 %v942
  %1000 = vmatpush1.bf16.msra.mxu0 %v941
  %1001 = vmatprep.subr.bf16.mxu0 %v940
  %1002 = vmatpush1.bf16.msra.mxu0 %v939
  %1003 = vmatprep.subr.bf16.mxu0 %v938
  %1004 = vmatpush1.bf16.msra.mxu0 %v937
  %1005 = vmatprep.subr.bf16.mxu0 %v936
  %1006 = vmatpush1.bf16.msra.mxu0 %v935
  %1007 = vmatprep.subr.bf16.mxu0 %v934
  %1008 = vmatpush1.bf16.msra.mxu0 %v933
  %1009 = vmatprep.subr.bf16.mxu0 %v932
  %1010 = vmatpush1.bf16.msra.mxu0 %v931
  %1011 = vmatprep.subr.bf16.mxu0 %v962
  %1012 = vmatpush2.bf16.msra.mxu0 %v961
  %1013 = vmatprep.subr.bf16.mxu0 %v960
  %1014 = vmatpush2.bf16.msra.mxu0 %v959
  %1015 = vmatprep.subr.bf16.mxu0 %v958
  %1016 = vmatpush2.bf16.msra.mxu0 %v957
  %1017 = vmatprep.subr.bf16.mxu0 %v956
  %1018 = vmatpush2.bf16.msra.mxu0 %v955
  %1019 = vmatprep.subr.bf16.mxu0 %v954
  %1020 = vmatpush2.bf16.msra.mxu0 %v953
  %1021 = vmatprep.subr.bf16.mxu0 %v952
  %1022 = vmatpush2.bf16.msra.mxu0 %v951
  %1023 = vmatprep.subr.bf16.mxu0 %v950
  %1024 = vmatpush2.bf16.msra.mxu0 %v949
  %1025 = vmatprep.subr.bf16.mxu0 %v948
  %1026 = vmatpush2.bf16.msra.mxu0 %v947
  %1027 = vmatprep.mubr.bf16.mxu0 %v815
  %1028 = vmatmul.mubr.bf16.gmra.mxu0 %v814
  %v1029 = vpop.f32.mrf.mxu0
  %v1030 = vadd.f32 %v828, %v1029
  %v1031 = vpop.f32.mrf.mxu0
  %v1032 = vadd.f32 %v832, %v1031
  %v1033 = vpop.f32.mrf.mxu0
  %v1034 = vadd.f32 %v828, %v1033
  %v1035 = vpop.f32.mrf.mxu0
  %v1036 = vadd.f32 %v832, %v1035
  %1037 = vmatprep.mubr.bf16.mxu0 %v817
  %1038 = vmatmul.mubr.bf16.gmra.mxu0 %v816
  %v1039 = vpop.f32.mrf.mxu0
  %v1040 = vadd.f32 %v828, %v1039
  %v1041 = vpop.f32.mrf.mxu0
  %v1042 = vadd.f32 %v832, %v1041
  %v1043 = vpop.f32.mrf.mxu0
  %v1044 = vadd.f32 %v828, %v1043
  %v1045 = vpop.f32.mrf.mxu0
  %v1046 = vadd.f32 %v832, %v1045
  %1047 = vmatprep.mubr.bf16.mxu0 %v819
  %1048 = vmatmul.mubr.bf16.gmra.mxu0 %v818
  %v1049 = vpop.f32.mrf.mxu0
  %v1050 = vadd.f32 %v828, %v1049
  %v1051 = vpop.f32.mrf.mxu0
  %v1052 = vadd.f32 %v832, %v1051
  %v1053 = vpop.f32.mrf.mxu0
  %v1054 = vadd.f32 %v828, %v1053
  %v1055 = vpop.f32.mrf.mxu0
  %v1056 = vadd.f32 %v832, %v1055
  %1057 = vmatprep.mubr.bf16.mxu0 %v821
  %1058 = vmatmul.mubr.bf16.gmra.mxu0 %v820
  %v1059 = vpop.f32.mrf.mxu0
  %v1060 = vadd.f32 %v828, %v1059
  %v1061 = vpop.f32.mrf.mxu0
  %v1062 = vadd.f32 %v832, %v1061
  %v1063 = vpop.f32.mrf.mxu0
  %v1064 = vpop.f32.mrf.mxu0
  %1065 = vdwg.mxu0
  %v1066 = vmax.f32 %v1030, 0.0
  %v1067 = vmax.f32 %v1032, 0.0
  %v1068 = vmax.f32 %v1034, 0.0
  %v1069 = vmax.f32 %v1036, 0.0
  %v1070 = vmax.f32 %v1040, 0.0
  %v1071 = vmax.f32 %v1042, 0.0
  %v1072 = vmax.f32 %v1044, 0.0
  %v1073 = vmax.f32 %v1046, 0.0
  %v1074 = vmax.f32 %v1050, 0.0
  %v1075 = vmax.f32 %v1052, 0.0
  %v1076 = vmax.f32 %v1054, 0.0
  %v1077 = vmax.f32 %v1056, 0.0
  %v1078 = vmax.f32 %v1060, 0.0
  %v1079 = vmax.f32 %v1062, 0.0
  %v1080 = vld [vmem:[%s1 + $0x100] sm:$0xf]
  %v1081 = vld [vmem:[%s1 + $0x108] sm:$0xf]
  %v1082 = vld [vmem:[%s1 + $0x110] sm:$0xf]
  %v1083 = vld [vmem:[%s1 + $0x118] sm:$0xf]
  %v1084 = vld [vmem:[%s1 + $0x120] sm:$0xf]
  %v1085 = vld [vmem:[%s1 + $0x128] sm:$0xf]
  %v1086 = vld [vmem:[%s1 + $0x130] sm:$0xf]
  %v1087 = vld [vmem:[%s1 + $0x138] sm:$0xf]
  %v1088 = vld [vmem:[%s1 + $0x140] sm:$0xf]
  %v1089 = vld [vmem:[%s1 + $0x148] sm:$0xf]
  %v1090 = vld [vmem:[%s1 + $0x150] sm:$0xf]
  %v1091 = vld [vmem:[%s1 + $0x158] sm:$0xf]
  %v1092 = vld [vmem:[%s1 + $0x160] sm:$0xf]
  %v1093 = vld [vmem:[%s1 + $0x168] sm:$0xf]
  %v1094 = vld [vmem:[%s1 + $0x170] sm:$0xf]
  %v1095 = vld [vmem:[%s1 + $0x178] sm:$0xf]
  %v1096 = vld [vmem:[%s1 + $0x180] sm:$0xf]
  %v1097 = vld [vmem:[%s1 + $0x188] sm:$0xf]
  %v1098 = vld [vmem:[%s1 + $0x190] sm:$0xf]
  %v1099 = vld [vmem:[%s1 + $0x198] sm:$0xf]
  %v1100 = vld [vmem:[%s1 + $0x1a0] sm:$0xf]
  %v1101 = vld [vmem:[%s1 + $0x1a8] sm:$0xf]
  %v1102 = vld [vmem:[%s1 + $0x1b0] sm:$0xf]
  %v1103 = vld [vmem:[%s1 + $0x1b8] sm:$0xf]
  %v1104 = vld [vmem:[%s1 + $0x1c0] sm:$0xf]
  %v1105 = vld [vmem:[%s1 + $0x1c8] sm:$0xf]
  %v1106 = vld [vmem:[%s1 + $0x1d0] sm:$0xf]
  %v1107 = vld [vmem:[%s1 + $0x1d8] sm:$0xf]
  %v1108 = vld [vmem:[%s1 + $0x1e0] sm:$0xf]
  %v1109 = vld [vmem:[%s1 + $0x1e8] sm:$0xf]
  %v1110 = vld [vmem:[%s1 + $0x1f0] sm:$0xf]
  %v1111 = vld [vmem:[%s1 + $0x1f8] sm:$0xf]
  %v1112 = vpack.c.bf16 %v1068, %v1066
  %v1113 = vpack.c.bf16 %v1069, %v1067
  %v1114 = vpack.c.bf16 %v1072, %v1070
  %v1115 = vpack.c.bf16 %v1073, %v1071
  %v1116 = vpack.c.bf16 %v1076, %v1074
  %v1117 = vpack.c.bf16 %v1077, %v1075
  %v1118 = vpack.c.bf16 %v1078, %v1078
  %v1119 = vpack.c.bf16 %v1079, %v1079
  %v1120 = vld [vmem:[%s3 + $0x2] sm:$0x1]
  %v1121 = vlaneseq
  %v1122 = vshrl.u32 %v1121, 7
  %v1123 = vsub.s32 0, %v1122
  %v1124 = vrot.slane %v1120, %v1123
  %v1157 = vunpack.c.l.b16 %v1080
  %v1158 = vunpack.c.l.b16 %v1081
  %v1159 = vunpack.c.l.b16 %v1082
  %v1160 = vunpack.c.l.b16 %v1083
  %v1161 = vunpack.c.l.b16 %v1084
  %v1162 = vunpack.c.l.b16 %v1085
  %v1163 = vunpack.c.l.b16 %v1086
  %v1164 = vunpack.c.l.b16 %v1087
  %v1165 = vunpack.c.l.b16 %v1088
  %v1166 = vunpack.c.l.b16 %v1089
  %v1167 = vunpack.c.l.b16 %v1090
  %v1168 = vunpack.c.l.b16 %v1091
  %v1169 = vunpack.c.l.b16 %v1092
  %v1170 = vunpack.c.l.b16 %v1093
  %v1171 = vunpack.c.l.b16 %v1094
  %v1172 = vunpack.c.l.b16 %v1095
  %v1173 = vunpack.c.l.b16 %v1096
  %v1174 = vunpack.c.l.b16 %v1097
  %v1175 = vunpack.c.l.b16 %v1098
  %v1176 = vunpack.c.l.b16 %v1099
  %v1177 = vunpack.c.l.b16 %v1100
  %v1178 = vunpack.c.l.b16 %v1101
  %v1179 = vunpack.c.l.b16 %v1102
  %v1180 = vunpack.c.l.b16 %v1103
  %v1181 = vunpack.c.l.b16 %v1104
  %v1182 = vunpack.c.l.b16 %v1105
  %v1183 = vunpack.c.l.b16 %v1106
  %v1184 = vunpack.c.l.b16 %v1107
  %v1185 = vunpack.c.l.b16 %v1108
  %v1186 = vunpack.c.l.b16 %v1109
  %v1187 = vunpack.c.l.b16 %v1110
  %v1188 = vunpack.c.l.b16 %v1111
  %v1189 = vpack.c.b16 %v1158, %v1157
  %v1190 = vpack.c.b16 %v1160, %v1159
  %v1191 = vpack.c.b16 %v1162, %v1161
  %v1192 = vpack.c.b16 %v1164, %v1163
  %v1193 = vpack.c.b16 %v1166, %v1165
  %v1194 = vpack.c.b16 %v1168, %v1167
  %v1195 = vpack.c.b16 %v1170, %v1169
  %v1196 = vpack.c.b16 %v1172, %v1171
  %v1197 = vpack.c.b16 %v1174, %v1173
  %v1198 = vpack.c.b16 %v1176, %v1175
  %v1199 = vpack.c.b16 %v1178, %v1177
  %v1200 = vpack.c.b16 %v1180, %v1179
  %v1201 = vpack.c.b16 %v1182, %v1181
  %v1202 = vpack.c.b16 %v1184, %v1183
  %v1203 = vpack.c.b16 %v1186, %v1185
  %v1204 = vpack.c.b16 %v1188, %v1187
  %1221 = vmatprep.subr.bf16.mxu0 0
  %1222 = vmatpush1.bf16.msra.mxu0 %v1196
  %1223 = vmatprep.subr.bf16.mxu0 0
  %1224 = vmatpush1.bf16.msra.mxu0 %v1195
  %1225 = vmatprep.subr.bf16.mxu0 0
  %1226 = vmatpush1.bf16.msra.mxu0 %v1194
  %1227 = vmatprep.subr.bf16.mxu0 0
  %1228 = vmatpush1.bf16.msra.mxu0 %v1193
  %1229 = vmatprep.subr.bf16.mxu0 0
  %1230 = vmatpush1.bf16.msra.mxu0 %v1192
  %1231 = vmatprep.subr.bf16.mxu0 0
  %1232 = vmatpush1.bf16.msra.mxu0 %v1191
  %1233 = vmatprep.subr.bf16.mxu0 0
  %1234 = vmatpush1.bf16.msra.mxu0 %v1190
  %1235 = vmatprep.subr.bf16.mxu0 0
  %1236 = vmatpush1.bf16.msra.mxu0 %v1189
  %1237 = vmatprep.subr.bf16.mxu0 0
  %1238 = vmatpush2.bf16.msra.mxu0 %v1204
  %1239 = vmatprep.subr.bf16.mxu0 0
  %1240 = vmatpush2.bf16.msra.mxu0 %v1203
  %1241 = vmatprep.subr.bf16.mxu0 0
  %1242 = vmatpush2.bf16.msra.mxu0 %v1202
  %1243 = vmatprep.subr.bf16.mxu0 0
  %1244 = vmatpush2.bf16.msra.mxu0 %v1201
  %1245 = vmatprep.subr.bf16.mxu0 0
  %1246 = vmatpush2.bf16.msra.mxu0 %v1200
  %1247 = vmatprep.subr.bf16.mxu0 0
  %1248 = vmatpush2.bf16.msra.mxu0 %v1199
  %1249 = vmatprep.subr.bf16.mxu0 0
  %1250 = vmatpush2.bf16.msra.mxu0 %v1198
  %1251 = vmatprep.subr.bf16.mxu0 0
  %1252 = vmatpush2.bf16.msra.mxu0 %v1197
  %1253 = vmatprep.mubr.bf16.mxu0 %v1113
  %1254 = vmatmul.mubr.bf16.gmra.mxu0 %v1112
  %v1255 = vpop.f32.mrf.mxu0
  %v1256 = vadd.f32 %v1124, %v1255
  %v1257 = vpop.f32.mrf.mxu0
  %v1258 = vpop.f32.mrf.mxu0
  %v1259 = vadd.f32 %v1124, %v1258
  %v1260 = vpop.f32.mrf.mxu0
  %1261 = vmatprep.mubr.bf16.mxu0 %v1115
  %1262 = vmatmul.mubr.bf16.gmra.mxu0 %v1114
  %v1263 = vpop.f32.mrf.mxu0
  %v1264 = vadd.f32 %v1124, %v1263
  %v1265 = vpop.f32.mrf.mxu0
  %v1266 = vpop.f32.mrf.mxu0
  %v1267 = vadd.f32 %v1124, %v1266
  %v1268 = vpop.f32.mrf.mxu0
  %1269 = vmatprep.mubr.bf16.mxu0 %v1117
  %1270 = vmatmul.mubr.bf16.gmra.mxu0 %v1116
  %v1271 = vpop.f32.mrf.mxu0
  %v1272 = vadd.f32 %v1124, %v1271
  %v1273 = vpop.f32.mrf.mxu0
  %v1274 = vpop.f32.mrf.mxu0
  %v1275 = vadd.f32 %v1124, %v1274
  %v1276 = vpop.f32.mrf.mxu0
  %1277 = vmatprep.mubr.bf16.mxu0 %v1119
  %1278 = vmatmul.mubr.bf16.gmra.mxu0 %v1118
  %v1279 = vpop.f32.mrf.mxu0
  %v1280 = vadd.f32 %v1124, %v1279
  %v1281 = vpop.f32.mrf.mxu0
  %v1282 = vpop.f32.mrf.mxu0
  %v1283 = vpop.f32.mrf.mxu0
  %1284 = vdwg.mxu0
  %1285 = vst [vmem:[%s5] sm:$0xff] %v1256
  %1286 = vst [vmem:[%s5 + $0x8] sm:$0xff] %v1259
  %1287 = vst [vmem:[%s5 + $0x10] sm:$0xff] %v1264
  %1288 = vst [vmem:[%s5 + $0x18] sm:$0xff] %v1267
  %1289 = vst [vmem:[%s5 + $0x20] sm:$0xff] %v1272
  %1290 = vst [vmem:[%s5 + $0x28] sm:$0xff] %v1275
  %1291 = vst [vmem:[%s5 + $0x30] sm:$0xff] %v1280
  // Predicated region
  $region22: #{decoder_blue_forward.1} parent=0 // pred_check
    _
  $region23: #{decoder_blue_forward.1} parent=0 // pred_check_branch
    %1293 = sbr.rel (0) target = $region25
  $region24: #{decoder_blue_forward.1} parent=0 // pred_region
    _
  $region25: #{decoder_blue_forward.1} parent=0 // pred_fallthru
    _
  // Predicated region
  $region26: #{decoder_blue_forward.1} parent=0 // pred_check
    _
  $region27: #{decoder_blue_forward.1} parent=0 // pred_check_branch
    %1295 = sbr.rel (0) target = $region29
  $region28: #{decoder_blue_forward.1} parent=0 // pred_region
    _
  $region29: #{decoder_blue_forward.1} parent=0 // pred_fallthru
    _

</llo_original>
